<compile_context>
chip_gen: v6e
topology: v6e:2x2x1
jax: 0.10.0
libtpu: 0.0.40
codegen_flags: <defaults>
</compile_context>

<pallas_src>
import numpy as np
import jax
import jax.numpy as jnp
from jax.experimental import pallas as pl
from jax.experimental.pallas import tpu as pltpu

_LANES = 128
_SUBLANES = 8
_VMEM_BUDGET_BYTES = 12 << 20   # x + alpha + beta, double-buffered; fits v5e default


def _cdiv(a, b):
    return -(-a // b)


def _round_up(a, m):
    return _cdiv(a, m) * m


def beta2_kernel(x_ref, logstd_ref, alpha_ref, beta_ref):
    """Elementwise Beta2 head on one lane-dense block.

    x_ref:      (T, Df)  pre-activations
    logstd_ref: (1, Df)  log-std row (tiled to lane-dense width)
    alpha_ref:  (T, Df)  output alpha
    beta_ref:   (T, Df)  output beta
    """
    x = x_ref[...]
    logstd = logstd_ref[...]

    mean = jax.nn.sigmoid(x)                   # EUP
    one_minus_mean = 1.0 - mean
    inv_var = jnp.exp(-2.0 * logstd)           # (1, Df) row; no per-element divide

    # u = (1 - mu) / var * mu - 1   (broadcast (T,Df) * (1,Df))
    u = one_minus_mean * inv_var * mean - 1.0
    alpha_ref[...] = mean * u                  # = (1-mu)/var*mu^2 - mu
    beta_ref[...] = one_minus_mean * u         # = (1-mu)/var*mu - 1 - alpha


def _plan(B, D):
    """Static (trace-time) lane-dense fold + row-tile plan.

    Returns (k, Dp, Bp, Bf, Df, tile, Bfp):
      k    rows folded into lanes,
      Dp   D padded to a lane-friendly width,
      Bp   B padded to a multiple of k,
      (Bf, Df) folded shape, tile row-tile, Bfp folded rows padded to the grid.
    """
    if D % _LANES == 0:
        k, Dp = 1, D
    elif _LANES % D == 0:
        k, Dp = _LANES // D, D
    else:
        k, Dp = 1, _round_up(D, _LANES)        # pad D up to a lane multiple

    Bp = _round_up(B, k)
    Bf = Bp // k
    Df = k * Dp

    # 6 big buffers per step: x, alpha, beta, each double-buffered.
    per_row_bytes = Df * 4 * 6
    budget_rows = max(
        _SUBLANES,
        (_VMEM_BUDGET_BYTES // per_row_bytes) // _SUBLANES * _SUBLANES)

    Bf8 = _round_up(Bf, _SUBLANES)
    n_steps = max(1, _cdiv(Bf8, budget_rows))
    if n_steps == 1 and Bf8 >= 16 * _SUBLANES:
        n_steps = 2                            # keep both v7x TensorCores busy
    tile = _round_up(_cdiv(Bf8, n_steps), _SUBLANES)
    Bfp = n_steps * tile
    return k, Dp, Bp, Bf, Df, tile, Bfp


@jax.jit
def beta2_forward(x, logstd):
    """x: (B, D) float32, logstd: (1, D) float32 -> (alpha, beta), each (B, D)."""
    B, D = x.shape
    k, Dp, Bp, Bf, Df, tile, Bfp = _plan(B, D)

    # Pad to lane-dense, multiple-of-tile shapes (no-ops for aligned shapes;
    # padded x rows/cols are zeros -> sigmoid(0)=0.5, exp(0)=1, all finite).
    x_p = jnp.pad(x, ((0, Bp - B), (0, Dp - D)))
    x_f = x_p.reshape(Bf, Df)
    if Bfp != Bf:
        x_f = jnp.pad(x_f, ((0, Bfp - Bf), (0, 0)))

    logstd_p = jnp.pad(logstd, ((0, 0), (0, Dp - D)))
    logstd_f = jnp.tile(logstd_p, (1, k)) if k > 1 else logstd_p

    grid = (Bfp // tile,)

    alpha_f, beta_f = pl.pallas_call(
        beta2_kernel,
        out_shape=(jax.ShapeDtypeStruct((Bfp, Df), x.dtype),
                   jax.ShapeDtypeStruct((Bfp, Df), x.dtype)),
        grid_spec=pltpu.PrefetchScalarGridSpec(
            num_scalar_prefetch=0,
            grid=grid,
            in_specs=[
                pl.BlockSpec((tile, Df), lambda i: (i, 0)),
                pl.BlockSpec((1, Df), lambda i: (0, 0)),
            ],
            out_specs=(
                pl.BlockSpec((tile, Df), lambda i: (i, 0)),
                pl.BlockSpec((tile, Df), lambda i: (i, 0)),
            ),
        ),
        compiler_params=pltpu.CompilerParams(
            dimension_semantics=("parallel",)),
    )(x_f, logstd_f)

    def unfold(o):
        o = o[:Bf].reshape(Bf * k, Dp)
        return o[:B, :D]

    return unfold(alpha_f), unfold(beta_f)


def beta2_reference(x, logstd):
    mean = jax.nn.sigmoid(x)
    var = jnp.exp(logstd) ** 2
    alpha = (1 - mean) / var * mean ** 2 - mean
    beta = (1 - mean) / var * mean - 1 - alpha
    return alpha, beta


def _check(B, D, key, logstd):
    x = jax.random.normal(key, (B, D), dtype=jnp.float32)
    alpha, beta = beta2_forward(x, logstd)
    jax.block_until_ready((alpha, beta))
    alpha_ref, beta_ref = beta2_reference(x, logstd)
    np.testing.assert_allclose(np.asarray(alpha), np.asarray(alpha_ref),
                               rtol=1e-5, atol=1e-5)
    np.testing.assert_allclose(np.asarray(beta), np.asarray(beta_ref),
                               rtol=1e-5, atol=1e-5)


if __name__ == "__main__":
    init_std = 0.25
    key = jax.random.PRNGKey(0)
    k0, k1, k2 = jax.random.split(key, 3)

    # Module-sized shape: batch=8, action_dim=32 -> folds to (8, 128), grid (1,).
    D0 = 32
    logstd0 = jnp.full((1, D0), np.log(init_std), dtype=jnp.float32)
    _check(8, D0, k0, logstd0)

    # Larger batch: lane fold (1024x32 -> 256x128), 2-step "parallel" grid.
    _check(1024, D0, k1, logstd0)

    # Ragged action_dim (not a divisor/multiple of 128): column-padding path,
    # stores stay unmasked on the padded 128-lane width.
    D1 = 48
    logstd1 = jnp.full((1, D1), np.log(init_std), dtype=jnp.float32)
    _check(96, D1, k2, logstd1)

    # TODO(synk): sample()/evaluate()/BoundedBeta.log_prob use
    # torch.distributions.Beta sampling/log_prob, which are host/XLA-level
    # distribution ops, not a Pallas kernel; only forward() is implemented here.
    print("KERNEL_OK")
</pallas_src>

<mosaic_0001>
module attributes {stable_mosaic.version = 11 : i64} {
  func.func @beta2_kernel(%arg0: i32, %arg1: memref<8x128xf32, #tpu.memory_space<vmem>>, %arg2: memref<1x128xf32, #tpu.memory_space<vmem>>, %arg3: memref<8x128xf32, #tpu.memory_space<vmem>>, %arg4: memref<8x128xf32, #tpu.memory_space<vmem>>) attributes {dimension_semantics = [#tpu.dimension_semantics<parallel>], iteration_bounds = array<i64: 1>, scalar_prefetch = 0 : i64, scratch_operands = 0 : i64, tpu.core_type = #tpu.core_type<tc>, window_params = [{transform_indices = @transform_0, window_bounds = array<i64: 8, 128>}, {pipeline_mode = #tpu.pipeline_mode<synchronous>, transform_indices = @transform_1, window_bounds = array<i64: 1, 128>}, {transform_indices = @transform_2, window_bounds = array<i64: 8, 128>}, {transform_indices = @transform_3, window_bounds = array<i64: 8, 128>}]} {
    %c0 = arith.constant 0 : index
    %c0_0 = arith.constant 0 : index
    %0 = vector.load %arg1[%c0, %c0_0] : memref<8x128xf32, #tpu.memory_space<vmem>>, vector<8x128xf32>
    %c0_1 = arith.constant 0 : index
    %c0_2 = arith.constant 0 : index
    %1 = vector.load %arg2[%c0_1, %c0_2] : memref<1x128xf32, #tpu.memory_space<vmem>>, vector<1x128xf32>
    %2 = arith.negf %0 : vector<8x128xf32>
    %3 = math.exp %2 : vector<8x128xf32>
    %cst = arith.constant 1.000000e+00 : f32
    %4 = vector.broadcast %cst : f32 to vector<8x128xf32>
    %5 = arith.addf %4, %3 : vector<8x128xf32>
    %6 = arith.divf %4, %5 : vector<8x128xf32>
    %cst_3 = arith.constant 1.000000e+00 : f32
    %7 = vector.broadcast %cst_3 : f32 to vector<8x128xf32>
    %8 = arith.subf %7, %6 : vector<8x128xf32>
    %cst_4 = arith.constant -2.000000e+00 : f32
    %9 = vector.broadcast %cst_4 : f32 to vector<1x128xf32>
    %10 = arith.mulf %9, %1 : vector<1x128xf32>
    %11 = math.exp %10 : vector<1x128xf32>
    %12 = vector.broadcast %11 : vector<1x128xf32> to vector<8x128xf32>
    %13 = arith.mulf %8, %12 : vector<8x128xf32>
    %14 = arith.mulf %13, %6 : vector<8x128xf32>
    %cst_5 = arith.constant 1.000000e+00 : f32
    %15 = vector.broadcast %cst_5 : f32 to vector<8x128xf32>
    %16 = arith.subf %14, %15 : vector<8x128xf32>
    %17 = arith.mulf %6, %16 : vector<8x128xf32>
    %c0_6 = arith.constant 0 : index
    %c0_7 = arith.constant 0 : index
    %18 = vector.load %arg3[%c0_6, %c0_7] : memref<8x128xf32, #tpu.memory_space<vmem>>, vector<8x128xf32>
    tpu.vector_store %arg3[%c0_6, %c0_7], %17 {strides = array<i32>} : memref<8x128xf32, #tpu.memory_space<vmem>>, vector<8x128xf32>,
    %19 = arith.mulf %8, %16 : vector<8x128xf32>
    %c0_8 = arith.constant 0 : index
    %c0_9 = arith.constant 0 : index
    %20 = vector.load %arg4[%c0_8, %c0_9] : memref<8x128xf32, #tpu.memory_space<vmem>>, vector<8x128xf32>
    tpu.vector_store %arg4[%c0_8, %c0_9], %19 {strides = array<i32>} : memref<8x128xf32, #tpu.memory_space<vmem>>, vector<8x128xf32>,
    return
  }
  func.func @transform_0(%arg0: i32) -> (i32, i32) {
    %c0_i32 = arith.constant 0 : i32
    %c0_i32_0 = arith.constant 0 : i32
    return %arg0, %c0_i32 : i32, i32
  }
  func.func @transform_1(%arg0: i32) -> (i32, i32) {
    %c0_i32 = arith.constant 0 : i32
    %c0_i32_0 = arith.constant 0 : i32
    %c0_i32_1 = arith.constant 0 : i32
    return %c0_i32, %c0_i32_0 : i32, i32
  }
  func.func @transform_2(%arg0: i32) -> (i32, i32) {
    %c0_i32 = arith.constant 0 : i32
    %c0_i32_0 = arith.constant 0 : i32
    return %arg0, %c0_i32 : i32, i32
  }
  func.func @transform_3(%arg0: i32) -> (i32, i32) {
    %c0_i32 = arith.constant 0 : i32
    %c0_i32_0 = arith.constant 0 : i32
    return %arg0, %c0_i32 : i32, i32
  }
}

</mosaic_0001>

<llo_original>
// kernel: beta2_forward.1
$region0: #{beta2_forward.1}
  #allocation0 [shape = 'u32[]', space=smem, size = 0x4, offset = 0x4, fixed_abs, tag = 'smem constant byte address 0x4 - core index']
  #allocation1 [shape = 'u32[144,128]{1,0:T(1,128)}', space=vmem, size = 0x12000, scoped, tag = 'internal scratch']
  %s0 = inlined_call_operand.vmem [shape: f32[8,128], index: 0, kind: input, shape index: {}]
  %s1 = inlined_call_operand.vmem [shape: f32[1,128], index: 1, kind: input, shape index: {}]
  %s2 = inlined_call_operand.vmem [shape: f32[8,128], index: 2, kind: output, shape index: {0}]
  %s3 = inlined_call_operand.vmem [shape: f32[8,128], index: 3, kind: output, shape index: {1}]
  %4 = xla_tuple %s2, %s3
  %s5 = sld [smem:[#allocation0]]
  $region26: #{beta2_forward.1} parent=0
    _
  %s7 = ssub.s32 1, %s5
  %s8 = scalar_select 0, %s7, %s5
  // Predicated region
  $region2: #{beta2_forward.1} parent=0 // pred_check
    _
  $region3: #{beta2_forward.1} parent=0 // pred_check_branch
    %10 = sbr.rel (0) target = $region5
  $region4: #{beta2_forward.1} parent=0 // pred_region
    _
  $region5: #{beta2_forward.1} parent=0 // pred_fallthru
    _
  // Predicated region
  $region6: #{beta2_forward.1} parent=0 // pred_check
    _
  $region7: #{beta2_forward.1} parent=0 // pred_check_branch
    %12 = sbr.rel (0) target = $region9
  $region8: #{beta2_forward.1} parent=0 // pred_region
    _
  $region9: #{beta2_forward.1} parent=0 // pred_fallthru
    _
  %v13 = vld [vmem:[%s0] sm:$0xff]
  %v14 = vld [vmem:[%s1] sm:$0x1]
  %v15 = vxor.u32 %v13, 2147483648
  %v16 = vmul.f32 %v15, 1.442695
  %v17 = vpow.pop %v16
  %v18 = vadd.f32 %v17, 1.0
  %v19 = vrcp.pop %v18
  %v20 = vmul.f32 1.0, %v19
  %v21 = vsub.f32 1.0, %v20
  %v22 = vmul.f32 %v14, -2.0
  %v23 = vmul.f32 %v22, 1.442695
  %v24 = vpow.pop %v23
  %v26 = vlaneseq
  %v27 = vshrl.u32 %v26, 7
  %v28 = vsub.s32 0, %v27
  %v29 = vrot.slane %v24, %v28
  %v31 = vmul.f32 %v21, %v29
  %v32 = vmul.f32 %v31, %v20
  %v33 = vsub.f32 %v32, 1.0
  %v34 = vmul.f32 %v20, %v33
  %35 = vst [vmem:[%s2] sm:$0xff] %v34
  %v36 = vmul.f32 %v21, %v33
  %37 = vst [vmem:[%s3] sm:$0xff] %v36
  // Predicated region
  $region10: #{beta2_forward.1} parent=0 // pred_check
    _
  $region11: #{beta2_forward.1} parent=0 // pred_check_branch
    %39 = sbr.rel (0) target = $region13
  $region12: #{beta2_forward.1} parent=0 // pred_region
    _
  $region13: #{beta2_forward.1} parent=0 // pred_fallthru
    _
  // Predicated region
  $region14: #{beta2_forward.1} parent=0 // pred_check
    _
  $region15: #{beta2_forward.1} parent=0 // pred_check_branch
    %41 = sbr.rel (0) target = $region17
  $region16: #{beta2_forward.1} parent=0 // pred_region
    _
  $region17: #{beta2_forward.1} parent=0 // pred_fallthru
    _
  // Predicated region
  $region18: #{beta2_forward.1} parent=0 // pred_check
    _
  $region19: #{beta2_forward.1} parent=0 // pred_check_branch
    %43 = sbr.rel (0) target = $region21
  $region20: #{beta2_forward.1} parent=0 // pred_region
    _
  $region21: #{beta2_forward.1} parent=0 // pred_fallthru
    _
  // Predicated region
  $region22: #{beta2_forward.1} parent=0 // pred_check
    _
  $region23: #{beta2_forward.1} parent=0 // pred_check_branch
    %45 = sbr.rel (0) target = $region25
  $region24: #{beta2_forward.1} parent=0 // pred_region
    _
  $region25: #{beta2_forward.1} parent=0 // pred_fallthru
    _

</llo_original>
